<compile_context>
chip_gen: v7x
topology: tpu7x:2x2x1
jax: 0.10.0
libtpu: 0.0.40
codegen_flags: <defaults>
</compile_context>

<pallas_src>
import functools

import jax
import jax.numpy as jnp
from jax import lax
from jax.experimental import pallas as pl
from jax.experimental.pallas import tpu as pltpu


def _bio_head_kernel(x_ref, w1_ref, b1_ref, gamma_ref, beta_ref,
                     w2_ref, b2_ref, o_ref, *, eps):
    # ---- dense: x @ W1 + b1 (MXU, f32 accumulate) ---------------------------
    x = x_ref[...]
    w1 = w1_ref[...]
    if x.dtype != w1.dtype:                 # feed the MXU a single native dtype
        x = x.astype(w1.dtype)
    h = jnp.dot(x, w1, preferred_element_type=jnp.float32)
    h = h + b1_ref[...].astype(jnp.float32)

    # ---- exact gelu (matches torch.nn.functional.gelu default) --------------
    h = 0.5 * h * (1.0 + lax.erf(h * jnp.float32(0.7071067811865476)))

    # ---- layernorm over hidden dim (kept in f32) -----------------------------
    mu = jnp.mean(h, axis=-1, keepdims=True)
    var = jnp.mean((h - mu) * (h - mu), axis=-1, keepdims=True)
    h = (h - mu) * lax.rsqrt(var + jnp.float32(eps))
    h = h * gamma_ref[...].astype(jnp.float32) + beta_ref[...].astype(jnp.float32)

    # ---- decoder: h @ W2 + b2 (W2 lane-padded to a multiple of 128 cols) ----
    w2 = w2_ref[...]
    if w2.dtype != jnp.float32:
        h = h.astype(w2.dtype)
    out = jnp.dot(h, w2, preferred_element_type=jnp.float32)
    out = out + b2_ref[...].astype(jnp.float32)

    o_ref[...] = out.astype(o_ref.dtype)


def bio_classification_head(features, params, *, eps=1e-12, row_tile=256):
    """features: (batch, seq, hidden) -> logits (batch, seq, num_labels)."""
    assert row_tile % 8 == 0, "row_tile must be a multiple of 8 (sublane)"
    B, S, H = features.shape
    L = params["w2"].shape[1]

    x = features.reshape(B * S, H)
    R = B * S

    # Effective row tile: don't use a tile much larger than the problem,
    # but stay a multiple of 8 (sublane constraint).
    tr = min(row_tile, 8 * pl.cdiv(R, 8))
    Rp = tr * pl.cdiv(R, tr)                      # rows padded to a tile multiple
    if Rp != R:
        x = jnp.pad(x, ((0, Rp - R), (0, 0)))

    # Lane-dense decoder output: pad num_labels up to a multiple of 128.
    Lp = 128 * pl.cdiv(L, 128)
    w2, b2 = params["w2"], params["b2"]
    if Lp != L:
        w2 = jnp.pad(w2, ((0, 0), (0, Lp - L)))
        b2 = jnp.pad(b2, ((0, 0), (0, Lp - L)))

    # VMEM budget: double-buffered activation tiles + (double-buffered) resident
    # params + headroom for the f32 intermediates in the kernel body.
    # TODO(synk): for very large H (>= 2048, esp. on v7x's 64 MiB VMEM), add a
    # trailing K grid axis for w1 with an f32 accumulator instead of keeping the
    # full (H, H) weight block resident.
    act_b = jnp.dtype(features.dtype).itemsize
    par_b = jnp.dtype(params["w1"].dtype).itemsize
    est = (2 * tr * (H + Lp) * act_b
           + 2 * (H * H + H * Lp + 4 * H + Lp) * par_b
           + 6 * tr * H * 4)
    vmem_limit = int(min(max(est + (4 << 20), 32 << 20), 64 << 20))

    kernel = functools.partial(_bio_head_kernel, eps=eps)

    out = pl.pallas_call(
        kernel,
        out_shape=jax.ShapeDtypeStruct((Rp, Lp), features.dtype),
        grid_spec=pltpu.PrefetchScalarGridSpec(
            num_scalar_prefetch=0,
            grid=(Rp // tr,),
            in_specs=[
                pl.BlockSpec((tr, H), lambda i: (i, 0)),   # x row tile
                pl.BlockSpec((H, H), lambda i: (0, 0)),    # dense weight (resident)
                pl.BlockSpec((1, H), lambda i: (0, 0)),    # dense bias
                pl.BlockSpec((1, H), lambda i: (0, 0)),    # LN gamma
                pl.BlockSpec((1, H), lambda i: (0, 0)),    # LN beta
                pl.BlockSpec((H, Lp), lambda i: (0, 0)),   # decoder weight (lane-padded)
                pl.BlockSpec((1, Lp), lambda i: (0, 0)),   # decoder bias (lane-padded)
            ],
            out_specs=pl.BlockSpec((tr, Lp), lambda i: (i, 0)),
        ),
        compiler_params=pltpu.CompilerParams(
            dimension_semantics=("parallel",),
            vmem_limit_bytes=vmem_limit),
    )(x, params["w1"], params["b1"], params["gamma"], params["beta"], w2, b2)

    return out[:R, :L].reshape(B, S, L)


def init_params(key, hidden, num_labels, dtype=jnp.float32):
    k1, k2 = jax.random.split(key, 2)
    scale = 1.0 / jnp.sqrt(hidden).astype(jnp.float32)
    return {
        # stored as (in, out): transpose of PyTorch nn.Linear.weight
        "w1": (jax.random.normal(k1, (hidden, hidden), jnp.float32) * scale).astype(dtype),
        "b1": jnp.zeros((1, hidden), dtype),
        "gamma": jnp.ones((1, hidden), dtype),      # nn.LayerNorm weight init
        "beta": jnp.zeros((1, hidden), dtype),      # nn.LayerNorm bias init
        "w2": (jax.random.normal(k2, (hidden, num_labels), jnp.float32) * scale).astype(dtype),
        "b2": jnp.zeros((1, num_labels), dtype),    # self.bias = zeros(num_labels)
    }


def _reference(features, params, eps):
    # pure-JAX reference for sanity checking
    x = features.astype(jnp.float32)
    h = x @ params["w1"].astype(jnp.float32) + params["b1"].astype(jnp.float32)
    h = 0.5 * h * (1.0 + lax.erf(h / jnp.sqrt(2.0)))
    mu = jnp.mean(h, -1, keepdims=True)
    var = jnp.mean((h - mu) ** 2, -1, keepdims=True)
    h = (h - mu) / jnp.sqrt(var + eps)
    h = h * params["gamma"].astype(jnp.float32) + params["beta"].astype(jnp.float32)
    return (h @ params["w2"].astype(jnp.float32)
            + params["b2"].astype(jnp.float32)).astype(features.dtype)


if __name__ == "__main__":
    batch, seq, hidden, num_labels = 2, 8, 32, 5
    eps = 1e-12

    key = jax.random.PRNGKey(0)
    kx, kp = jax.random.split(key)
    features = jax.random.normal(kx, (batch, seq, hidden), jnp.float32)
    params = init_params(kp, hidden, num_labels)

    logits = bio_classification_head(features, params, eps=eps, row_tile=256)
    logits = jax.block_until_ready(logits)

    ref = _reference(features, params, eps).reshape(batch, seq, num_labels)
    assert logits.shape == (batch, seq, num_labels)
    assert jnp.allclose(logits, ref, atol=1e-4, rtol=1e-4)

    print("KERNEL_OK")
</pallas_src>

<mosaic_0001>
module attributes {stable_mosaic.version = 11 : i64} {
  func.func @_bio_head_kernel(%arg0: i32, %arg1: memref<16x32xf32, #tpu.memory_space<vmem>>, %arg2: memref<32x32xf32, #tpu.memory_space<vmem>>, %arg3: memref<1x32xf32, #tpu.memory_space<vmem>>, %arg4: memref<1x32xf32, #tpu.memory_space<vmem>>, %arg5: memref<1x32xf32, #tpu.memory_space<vmem>>, %arg6: memref<32x128xf32, #tpu.memory_space<vmem>>, %arg7: memref<1x128xf32, #tpu.memory_space<vmem>>, %arg8: memref<16x128xf32, #tpu.memory_space<vmem>>) attributes {dimension_semantics = [#tpu.dimension_semantics<parallel>], iteration_bounds = array<i64: 1>, scalar_prefetch = 0 : i64, scratch_operands = 0 : i64, tpu.core_type = #tpu.core_type<tc>, window_params = [{transform_indices = @transform_0, window_bounds = array<i64: 16, 32>}, {pipeline_mode = #tpu.pipeline_mode<synchronous>, transform_indices = @transform_1, window_bounds = array<i64: 32, 32>}, {pipeline_mode = #tpu.pipeline_mode<synchronous>, transform_indices = @transform_2, window_bounds = array<i64: 1, 32>}, {pipeline_mode = #tpu.pipeline_mode<synchronous>, transform_indices = @transform_3, window_bounds = array<i64: 1, 32>}, {pipeline_mode = #tpu.pipeline_mode<synchronous>, transform_indices = @transform_4, window_bounds = array<i64: 1, 32>}, {pipeline_mode = #tpu.pipeline_mode<synchronous>, transform_indices = @transform_5, window_bounds = array<i64: 32, 128>}, {pipeline_mode = #tpu.pipeline_mode<synchronous>, transform_indices = @transform_6, window_bounds = array<i64: 1, 128>}, {transform_indices = @transform_7, window_bounds = array<i64: 16, 128>}]} {
    %c0 = arith.constant 0 : index
    %c0_0 = arith.constant 0 : index
    %0 = vector.load %arg1[%c0, %c0_0] : memref<16x32xf32, #tpu.memory_space<vmem>>, vector<16x32xf32>
    %c0_1 = arith.constant 0 : index
    %c0_2 = arith.constant 0 : index
    %1 = vector.load %arg2[%c0_1, %c0_2] : memref<32x32xf32, #tpu.memory_space<vmem>>, vector<32x32xf32>
    %cst = arith.constant dense<0.000000e+00> : vector<16x32xf32>
    %2 = tpu.matmul %0, %1, %cst {dimension_numbers = #tpu.dot_dimension_numbers<[1], [0], [0], [1], [0, 0, 1, 1], [], []>} : vector<16x32xf32>, vector<32x32xf32>, vector<16x32xf32> -> vector<16x32xf32>
    %c0_3 = arith.constant 0 : index
    %c0_4 = arith.constant 0 : index
    %3 = vector.load %arg3[%c0_3, %c0_4] : memref<1x32xf32, #tpu.memory_space<vmem>>, vector<1x32xf32>
    %4 = vector.broadcast %3 : vector<1x32xf32> to vector<16x32xf32>
    %5 = arith.addf %2, %4 : vector<16x32xf32>
    %cst_5 = arith.constant 5.000000e-01 : f32
    %6 = vector.broadcast %cst_5 : f32 to vector<16x32xf32>
    %7 = arith.mulf %6, %5 : vector<16x32xf32>
    %cst_6 = arith.constant 0.707106769 : f32
    %8 = vector.broadcast %cst_6 : f32 to vector<16x32xf32>
    %9 = arith.mulf %5, %8 : vector<16x32xf32>
    %10 = math.erf %9 : vector<16x32xf32>
    %cst_7 = arith.constant 1.000000e+00 : f32
    %11 = vector.broadcast %cst_7 : f32 to vector<16x32xf32>
    %12 = arith.addf %11, %10 : vector<16x32xf32>
    %13 = arith.mulf %7, %12 : vector<16x32xf32>
    %cst_8 = arith.constant dense<0.000000e+00> : vector<16xf32>
    %14 = vector.multi_reduction <add>, %13, %cst_8 [1] : vector<16x32xf32> to vector<16xf32>
    %15 = vector.shape_cast %14 : vector<16xf32> to vector<16x1xf32>
    %cst_9 = arith.constant 3.200000e+01 : f32
    %16 = vector.broadcast %cst_9 : f32 to vector<16x1xf32>
    %17 = arith.divf %15, %16 : vector<16x1xf32>
    %18 = vector.broadcast %17 : vector<16x1xf32> to vector<16x32xf32>
    %19 = arith.subf %13, %18 : vector<16x32xf32>
    %20 = vector.broadcast %17 : vector<16x1xf32> to vector<16x32xf32>
    %21 = arith.subf %13, %20 : vector<16x32xf32>
    %22 = arith.mulf %19, %21 : vector<16x32xf32>
    %cst_10 = arith.constant dense<0.000000e+00> : vector<16xf32>
    %23 = vector.multi_reduction <add>, %22, %cst_10 [1] : vector<16x32xf32> to vector<16xf32>
    %24 = vector.shape_cast %23 : vector<16xf32> to vector<16x1xf32>
    %cst_11 = arith.constant 3.200000e+01 : f32
    %25 = vector.broadcast %cst_11 : f32 to vector<16x1xf32>
    %26 = arith.divf %24, %25 : vector<16x1xf32>
    %27 = vector.broadcast %17 : vector<16x1xf32> to vector<16x32xf32>
    %28 = arith.subf %13, %27 : vector<16x32xf32>
    %cst_12 = arith.constant 9.99999996E-13 : f32
    %29 = vector.broadcast %cst_12 : f32 to vector<16x1xf32>
    %30 = arith.addf %26, %29 : vector<16x1xf32>
    %31 = math.rsqrt %30 : vector<16x1xf32>
    %32 = vector.broadcast %31 : vector<16x1xf32> to vector<16x32xf32>
    %33 = arith.mulf %28, %32 : vector<16x32xf32>
    %c0_13 = arith.constant 0 : index
    %c0_14 = arith.constant 0 : index
    %34 = vector.load %arg4[%c0_13, %c0_14] : memref<1x32xf32, #tpu.memory_space<vmem>>, vector<1x32xf32>
    %35 = vector.broadcast %34 : vector<1x32xf32> to vector<16x32xf32>
    %36 = arith.mulf %33, %35 : vector<16x32xf32>
    %c0_15 = arith.constant 0 : index
    %c0_16 = arith.constant 0 : index
    %37 = vector.load %arg5[%c0_15, %c0_16] : memref<1x32xf32, #tpu.memory_space<vmem>>, vector<1x32xf32>
    %38 = vector.broadcast %37 : vector<1x32xf32> to vector<16x32xf32>
    %39 = arith.addf %36, %38 : vector<16x32xf32>
    %c0_17 = arith.constant 0 : index
    %c0_18 = arith.constant 0 : index
    %40 = vector.load %arg6[%c0_17, %c0_18] : memref<32x128xf32, #tpu.memory_space<vmem>>, vector<32x128xf32>
    %cst_19 = arith.constant dense<0.000000e+00> : vector<16x128xf32>
    %41 = tpu.matmul %39, %40, %cst_19 {dimension_numbers = #tpu.dot_dimension_numbers<[1], [0], [0], [1], [0, 0, 1, 1], [], []>} : vector<16x32xf32>, vector<32x128xf32>, vector<16x128xf32> -> vector<16x128xf32>
    %c0_20 = arith.constant 0 : index
    %c0_21 = arith.constant 0 : index
    %42 = vector.load %arg7[%c0_20, %c0_21] : memref<1x128xf32, #tpu.memory_space<vmem>>, vector<1x128xf32>
    %43 = vector.broadcast %42 : vector<1x128xf32> to vector<16x128xf32>
    %44 = arith.addf %41, %43 : vector<16x128xf32>
    %c0_22 = arith.constant 0 : index
    %c0_23 = arith.constant 0 : index
    %45 = vector.load %arg8[%c0_22, %c0_23] : memref<16x128xf32, #tpu.memory_space<vmem>>, vector<16x128xf32>
    tpu.vector_store %arg8[%c0_22, %c0_23], %44 {strides = array<i32>} : memref<16x128xf32, #tpu.memory_space<vmem>>, vector<16x128xf32>,
    return
  }
  func.func @transform_0(%arg0: i32) -> (i32, i32) {
    %c0_i32 = arith.constant 0 : i32
    %c0_i32_0 = arith.constant 0 : i32
    return %arg0, %c0_i32 : i32, i32
  }
  func.func @transform_1(%arg0: i32) -> (i32, i32) {
    %c0_i32 = arith.constant 0 : i32
    %c0_i32_0 = arith.constant 0 : i32
    %c0_i32_1 = arith.constant 0 : i32
    return %c0_i32, %c0_i32_0 : i32, i32
  }
  func.func @transform_2(%arg0: i32) -> (i32, i32) {
    %c0_i32 = arith.constant 0 : i32
    %c0_i32_0 = arith.constant 0 : i32
    %c0_i32_1 = arith.constant 0 : i32
    return %c0_i32, %c0_i32_0 : i32, i32
  }
  func.func @transform_3(%arg0: i32) -> (i32, i32) {
    %c0_i32 = arith.constant 0 : i32
    %c0_i32_0 = arith.constant 0 : i32
    %c0_i32_1 = arith.constant 0 : i32
    return %c0_i32, %c0_i32_0 : i32, i32
  }
  func.func @transform_4(%arg0: i32) -> (i32, i32) {
    %c0_i32 = arith.constant 0 : i32
    %c0_i32_0 = arith.constant 0 : i32
    %c0_i32_1 = arith.constant 0 : i32
    return %c0_i32, %c0_i32_0 : i32, i32
  }
  func.func @transform_5(%arg0: i32) -> (i32, i32) {
    %c0_i32 = arith.constant 0 : i32
    %c0_i32_0 = arith.constant 0 : i32
    %c0_i32_1 = arith.constant 0 : i32
    return %c0_i32, %c0_i32_0 : i32, i32
  }
  func.func @transform_6(%arg0: i32) -> (i32, i32) {
    %c0_i32 = arith.constant 0 : i32
    %c0_i32_0 = arith.constant 0 : i32
    %c0_i32_1 = arith.constant 0 : i32
    return %c0_i32, %c0_i32_0 : i32, i32
  }
  func.func @transform_7(%arg0: i32) -> (i32, i32) {
    %c0_i32 = arith.constant 0 : i32
    %c0_i32_0 = arith.constant 0 : i32
    return %arg0, %c0_i32 : i32, i32
  }
}

</mosaic_0001>

<llo_original>
// kernel: tpu_custom_call.1
$region0: #{tpu_custom_call.1}
  #allocation0 [shape = 'u32[]', space=smem, size = 0x4, offset = 0x4, fixed_abs, tag = 'smem constant byte address 0x4 - core index']
  #allocation1 [shape = 'u32[144,128]{1,0:T(1,128)}', space=vmem, size = 0x12000, scoped, tag = 'internal scratch']
  %s0 = inlined_call_operand.hbm [shape: f32[16,32], index: 0, kind: input, shape index: {}]
  %s1 = inlined_call_operand.hbm [shape: f32[32,32], index: 1, kind: input, shape index: {}]
  %s2 = inlined_call_operand.vmem [shape: f32[1,32], index: 2, kind: input, shape index: {}]
  %s3 = inlined_call_operand.vmem [shape: f32[1,32], index: 3, kind: input, shape index: {}]
  %s4 = inlined_call_operand.vmem [shape: f32[1,32], index: 4, kind: input, shape index: {}]
  %s5 = inlined_call_operand.hbm [shape: f32[32,128], index: 5, kind: input, shape index: {}]
  %s6 = inlined_call_operand.vmem [shape: f32[1,128], index: 6, kind: input, shape index: {}]
  %s7 = inlined_call_operand.hbm [shape: f32[16,128], index: 7, kind: output, shape index: {}]
  %s8 = sld [smem:[#allocation0]]
  $region50: #{tpu_custom_call.1} parent=0
    _
  %s10 = ssub.s32 1, %s8
  %s11 = scalar_select 0, %s10, %s8
  $region1: #{tpu_custom_call.1} parent=0
    #allocation2 [shape = 'u8[8192]{0}', space=vmem, size = 0x2000, scoped, tag = 'input window, operand 0, single buffered']
    #allocation3 [shape = 's32[1]{0}', space=sflag, size = 0x4, scoped, tag = 'scoped memory for tpu_custom_call.1']
    #allocation4 [shape = 's32[1]{0}', space=sflag, size = 0x4, scoped, tag = 'scoped memory for tpu_custom_call.1']
    #allocation5 [shape = 'u8[16384]{0}', space=vmem, size = 0x4000, scoped, tag = 'input window, operand 1, single buffered']
    #allocation6 [shape = 's32[1]{0}', space=sflag, size = 0x4, scoped, tag = 'scoped memory for tpu_custom_call.1']
    #allocation7 [shape = 'u8[16384]{0}', space=vmem, size = 0x4000, scoped, tag = 'input window, operand 5, single buffered']
    #allocation8 [shape = 'u8[8192]{0}', space=vmem, size = 0x2000, scoped, tag = 'output window, operand 0, single buffered']
    %12 = vsyncpa [#allocation3], 0
    %13 = vsyncpa [#allocation6], 0
    %14 = vsyncpa [#allocation4], 0
    // Predicated region
    $region2: #{tpu_custom_call.1} parent=1 // pred_check
      _
    $region3: #{tpu_custom_call.1} parent=1 // pred_check_branch
      %16 = sbr.rel (0) target = $region5
    $region4: #{tpu_custom_call.1} parent=1 // pred_region
      %s18 = ssub.s32 256, 256
      %19 = vsyncadd [#allocation3], %s18
      %s20 = sshll.u32 [#allocation2], 4
      %s21 = int_to_ptr.vmem [resolvable:$true] %s20
      %26 = dma.hbm_to_vmem [thread:$0]  %s0, 256, %s21, [#allocation3], 128, 128, 8
    $region5: #{tpu_custom_call.1} parent=1 // pred_fallthru
      _
    // Predicated region
    $region6: #{tpu_custom_call.1} parent=1 // pred_check
      _
    $region7: #{tpu_custom_call.1} parent=1 // pred_check_branch
      %28 = sbr.rel (0) target = $region9
    $region8: #{tpu_custom_call.1} parent=1 // pred_region
      %s30 = ssub.s32 512, 512
      %31 = vsyncadd [#allocation6], %s30
      %s32 = sshll.u32 [#allocation5], 4
      %s33 = int_to_ptr.vmem [resolvable:$true] %s32
      %38 = dma.hbm_to_vmem [thread:$0]  %s1, 512, %s33, [#allocation6], 128, 128, 8
    $region9: #{tpu_custom_call.1} parent=1 // pred_fallthru
      _
    // Predicated region
    $region10: #{tpu_custom_call.1} parent=1 // pred_check
      _
    $region11: #{tpu_custom_call.1} parent=1 // pred_check_branch
      %40 = sbr.rel (0) target = $region13
    $region12: #{tpu_custom_call.1} parent=1 // pred_region
      _
    $region13: #{tpu_custom_call.1} parent=1 // pred_fallthru
      _
    // Predicated region
    $region14: #{tpu_custom_call.1} parent=1 // pred_check
      _
    $region15: #{tpu_custom_call.1} parent=1 // pred_check_branch
      %42 = sbr.rel (0) target = $region17
    $region16: #{tpu_custom_call.1} parent=1 // pred_region
      _
    $region17: #{tpu_custom_call.1} parent=1 // pred_fallthru
      _
    // Predicated region
    $region18: #{tpu_custom_call.1} parent=1 // pred_check
      _
    $region19: #{tpu_custom_call.1} parent=1 // pred_check_branch
      %44 = sbr.rel (0) target = $region21
    $region20: #{tpu_custom_call.1} parent=1 // pred_region
      _
    $region21: #{tpu_custom_call.1} parent=1 // pred_fallthru
      _
    // Predicated region
    $region22: #{tpu_custom_call.1} parent=1 // pred_check
      _
    $region23: #{tpu_custom_call.1} parent=1 // pred_check_branch
      %46 = sbr.rel (0) target = $region25
    $region24: #{tpu_custom_call.1} parent=1 // pred_region
      %s48 = ssub.s32 512, 512
      %49 = vsyncadd [#allocation6], %s48
      %s50 = sshll.u32 [#allocation7], 4
      %s51 = int_to_ptr.vmem [resolvable:$true] %s50
      %56 = dma.hbm_to_vmem [thread:$0]  %s5, 512, %s51, [#allocation6], 128, 128, 8
    $region25: #{tpu_custom_call.1} parent=1 // pred_fallthru
      _
    // Predicated region
    $region26: #{tpu_custom_call.1} parent=1 // pred_check
      _
    $region27: #{tpu_custom_call.1} parent=1 // pred_check_branch
      %58 = sbr.rel (0) target = $region29
    $region28: #{tpu_custom_call.1} parent=1 // pred_region
      _
    $region29: #{tpu_custom_call.1} parent=1 // pred_fallthru
      _
    // Predicated region
    $region30: #{tpu_custom_call.1} parent=1 // pred_check
      _
    $region31: #{tpu_custom_call.1} parent=1 // pred_check_branch
      %60 = sbr.rel (0) target = $region33
    $region32: #{tpu_custom_call.1} parent=1 // pred_region
      %61 = dma.done [#allocation3], 256
    $region33: #{tpu_custom_call.1} parent=1 // pred_fallthru
      _
    // Predicated region
    $region34: #{tpu_custom_call.1} parent=1 // pred_check
      _
    $region35: #{tpu_custom_call.1} parent=1 // pred_check_branch
      %63 = sbr.rel (0) target = $region37
    $region36: #{tpu_custom_call.1} parent=1 // pred_region
      %64 = dma.done [#allocation6], 512
    $region37: #{tpu_custom_call.1} parent=1 // pred_fallthru
      _
    // Predicated region
    $region38: #{tpu_custom_call.1} parent=1 // pred_check
      _
    $region39: #{tpu_custom_call.1} parent=1 // pred_check_branch
      %66 = sbr.rel (0) target = $region41
    $region40: #{tpu_custom_call.1} parent=1 // pred_region
      %67 = dma.done [#allocation6], 512
    $region41: #{tpu_custom_call.1} parent=1 // pred_fallthru
      _
    %v68 = vld [vmem:[#allocation2] sm:$0xff]
    %v69 = vld [vmem:[#allocation2 + $0x8] sm:$0xff]
    %v70 = vld [vmem:[#allocation5] sm:$0xff]
    %v71 = vld [vmem:[#allocation5 + $0x8] sm:$0xff]
    %v72 = vld [vmem:[#allocation5 + $0x10] sm:$0xff]
    %v73 = vld [vmem:[#allocation5 + $0x18] sm:$0xff]
    %v74 = vld [vmem:[%s2] sm:$0x1]
    %v76 = vlaneseq
    %v77 = vshrl.u32 %v76, 7
    %v78 = vsub.s32 0, %v77
    %v79 = vrot.slane %v74, %v78
    %vm81 = vcmask 261120
    %v83 = vsel %vm81, %v68, 0
    %v86 = vsel %vm81, %v69, 0
    %88 = vmatprep.subr.mxu0 0.0
    %89 = vmatpush1.msra.mxu0 %v70
    %90 = vmatprep.subr.mxu0 0.0
    %91 = vmatpush1.msra.mxu0 %v71
    %92 = vmatprep.subr.mxu0 0.0
    %93 = vmatpush1.msra.mxu0 %v72
    %94 = vmatprep.subr.mxu0 0.0
    %95 = vmatpush1.msra.mxu0 %v73
    %96 = vmatprep.subr.mxu0 0.0
    %97 = vmatpush1.msra.mxu0 0.0
    %98 = vmatprep.subr.mxu0 0.0
    %99 = vmatpush1.msra.mxu0 0.0
    %100 = vmatprep.subr.mxu0 0.0
    %101 = vmatpush1.msra.mxu0 0.0
    %102 = vmatprep.subr.mxu0 0.0
    %103 = vmatpush1.msra.mxu0 0.0
    %104 = vmatprep.subr.mxu0 0.0
    %105 = vmatpush1.msra.mxu0 0.0
    %106 = vmatprep.subr.mxu0 0.0
    %107 = vmatpush1.msra.mxu0 0.0
    %108 = vmatprep.subr.mxu0 0.0
    %109 = vmatpush1.msra.mxu0 0.0
    %110 = vmatprep.subr.mxu0 0.0
    %111 = vmatpush1.msra.mxu0 0.0
    %112 = vmatprep.subr.mxu0 0.0
    %113 = vmatpush1.msra.mxu0 0.0
    %114 = vmatprep.subr.mxu0 0.0
    %115 = vmatpush1.msra.mxu0 0.0
    %116 = vmatprep.subr.mxu0 0.0
    %117 = vmatpush1.msra.mxu0 0.0
    %118 = vmatprep.subr.mxu0 0.0
    %119 = vmatpush1.msra.mxu0 0.0
    %120 = vmatprep.subr.mxu0 0.0
    %121 = vmatpush1.msra.mxu0 0.0
    %122 = vmatprep.subr.mxu0 0.0
    %123 = vmatpush1.msra.mxu0 0.0
    %124 = vmatprep.subr.mxu0 0.0
    %125 = vmatpush1.msra.mxu0 0.0
    %126 = vmatprep.subr.mxu0 0.0
    %127 = vmatpush1.msra.mxu0 0.0
    %128 = vmatprep.subr.mxu0 0.0
    %129 = vmatpush1.msra.mxu0 0.0
    %130 = vmatprep.subr.mxu0 0.0
    %131 = vmatpush1.msra.mxu0 0.0
    %132 = vmatprep.subr.mxu0 0.0
    %133 = vmatpush1.msra.mxu0 0.0
    %134 = vmatprep.subr.mxu0 0.0
    %135 = vmatpush1.msra.mxu0 0.0
    %136 = vmatprep.subr.mxu0 0.0
    %137 = vmatpush1.msra.mxu0 0.0
    %138 = vmatprep.subr.mxu0 0.0
    %139 = vmatpush1.msra.mxu0 0.0
    %140 = vmatprep.subr.mxu0 0.0
    %141 = vmatpush1.msra.mxu0 0.0
    %142 = vmatprep.subr.mxu0 0.0
    %143 = vmatpush1.msra.mxu0 0.0
    %144 = vmatprep.subr.mxu0 0.0
    %145 = vmatpush1.msra.mxu0 0.0
    %146 = vmatprep.subr.mxu0 0.0
    %147 = vmatpush1.msra.mxu0 0.0
    %148 = vmatprep.subr.mxu0 0.0
    %149 = vmatpush1.msra.mxu0 0.0
    %150 = vmatprep.subr.mxu0 0.0
    %151 = vmatpush1.msra.mxu0 0.0
    %152 = vmatprep.mubr.f32.mxu0 0.0
    %153 = vmatmul.mubr.f32.gmra.mrb[0].mxu0 %v83
    %v154 = vpop.f32.mrb[0].mxu0
    %v155 = vadd.f32 %v79, %v154
    %v156 = vpop.f32.mrb[0].mxu0
    %157 = vmatprep.mubr.f32.mxu0 0.0
    %158 = vmatmul.mubr.f32.gmra.mrb[0].mxu0 %v86
    %v159 = vpop.f32.mrb[0].mxu0
    %v160 = vadd.f32 %v79, %v159
    %v161 = vpop.f32.mrb[0].mxu0
    %162 = vdwg.mxu0
    %v163 = vmul.f32 %v155, 0.5
    %v164 = vmul.f32 %v160, 0.5
    %v165 = vmul.f32 %v155, 0.70710677
    %v166 = vmul.f32 %v160, 0.70710677
    %v167 = verf.f32.pop %v165
    %v168 = verf.f32.pop %v166
    %v169 = vadd.f32 %v167, 1.0
    %v170 = vadd.f32 %v168, 1.0
    %v171 = vmul.f32 %v163, %v169
    %v172 = vmul.f32 %v164, %v170
    %v173 = vsel %vm81, %v171, 0.0
    %174 = vadd.xlane.f32.xlu0 %v173
    %v175 = vpop.xlane.xlu0 %174
    %v176 = vsel %vm81, %v172, 0.0
    %177 = vadd.xlane.f32.xlu0 %v176
    %v178 = vpop.xlane.xlu0 %177
    %v179 = vrcp.pop 32.0
    %v180 = vmul.f32 %v175, %v179
    %v181 = vmul.f32 %v178, %v179
    %v182 = vsub.f32 %v171, %v180
    %v183 = vsub.f32 %v172, %v181
    %v184 = vmul.f32 %v182, %v182
    %v185 = vmul.f32 %v183, %v183
    %v186 = vsel %vm81, %v184, 0.0
    %187 = vadd.xlane.f32.xlu0 %v186
    %v188 = vpop.xlane.xlu0 %187
    %v189 = vsel %vm81, %v185, 0.0
    %190 = vadd.xlane.f32.xlu0 %v189
    %v191 = vpop.xlane.xlu0 %190
    %v192 = vmul.f32 %v188, %v179
    %v193 = vmul.f32 %v191, %v179
    %v194 = vadd.f32 %v192, 1e-12
    %v195 = vadd.f32 %v193, 1e-12
    %v196 = vrsqrt.pop %v194
    %v197 = vrsqrt.pop %v195
    %v198 = vmul.f32 %v182, %v196
    %v199 = vmul.f32 %v183, %v197
    %v200 = vld [vmem:[%s3] sm:$0x1]
    %v202 = vlaneseq
    %v203 = vshrl.u32 %v202, 7
    %v204 = vsub.s32 0, %v203
    %v205 = vrot.slane %v200, %v204
    %v207 = vmul.f32 %v198, %v205
    %v208 = vmul.f32 %v199, %v205
    %v209 = vld [vmem:[%s4] sm:$0x1]
    %v211 = vlaneseq
    %v212 = vshrl.u32 %v211, 7
    %v213 = vsub.s32 0, %v212
    %v214 = vrot.slane %v209, %v213
    %v216 = vadd.f32 %v207, %v214
    %v217 = vadd.f32 %v208, %v214
    %v218 = vld [vmem:[#allocation7] sm:$0xff]
    %v219 = vld [vmem:[#allocation7 + $0x8] sm:$0xff]
    %v220 = vld [vmem:[#allocation7 + $0x10] sm:$0xff]
    %v221 = vld [vmem:[#allocation7 + $0x18] sm:$0xff]
    %v222 = vld [vmem:[%s6] sm:$0x1]
    %v224 = vlaneseq
    %v225 = vshrl.u32 %v224, 7
    %v226 = vsub.s32 0, %v225
    %v227 = vrot.slane %v222, %v226
    %v230 = vsel %vm81, %v216, 0
    %v233 = vsel %vm81, %v217, 0
    %235 = vmatprep.subr.mxu0 0.0
    %236 = vmatpush1.msra.mxu0 %v218
    %237 = vmatprep.subr.mxu0 0.0
    %238 = vmatpush1.msra.mxu0 %v219
    %239 = vmatprep.subr.mxu0 0.0
    %240 = vmatpush1.msra.mxu0 %v220
    %241 = vmatprep.subr.mxu0 0.0
    %242 = vmatpush1.msra.mxu0 %v221
    %243 = vmatprep.subr.mxu0 0.0
    %244 = vmatpush1.msra.mxu0 0.0
    %245 = vmatprep.subr.mxu0 0.0
    %246 = vmatpush1.msra.mxu0 0.0
    %247 = vmatprep.subr.mxu0 0.0
    %248 = vmatpush1.msra.mxu0 0.0
    %249 = vmatprep.subr.mxu0 0.0
    %250 = vmatpush1.msra.mxu0 0.0
    %251 = vmatprep.subr.mxu0 0.0
    %252 = vmatpush1.msra.mxu0 0.0
    %253 = vmatprep.subr.mxu0 0.0
    %254 = vmatpush1.msra.mxu0 0.0
    %255 = vmatprep.subr.mxu0 0.0
    %256 = vmatpush1.msra.mxu0 0.0
    %257 = vmatprep.subr.mxu0 0.0
    %258 = vmatpush1.msra.mxu0 0.0
    %259 = vmatprep.subr.mxu0 0.0
    %260 = vmatpush1.msra.mxu0 0.0
    %261 = vmatprep.subr.mxu0 0.0
    %262 = vmatpush1.msra.mxu0 0.0
    %263 = vmatprep.subr.mxu0 0.0
    %264 = vmatpush1.msra.mxu0 0.0
    %265 = vmatprep.subr.mxu0 0.0
    %266 = vmatpush1.msra.mxu0 0.0
    %267 = vmatprep.subr.mxu0 0.0
    %268 = vmatpush1.msra.mxu0 0.0
    %269 = vmatprep.subr.mxu0 0.0
    %270 = vmatpush1.msra.mxu0 0.0
    %271 = vmatprep.subr.mxu0 0.0
    %272 = vmatpush1.msra.mxu0 0.0
    %273 = vmatprep.subr.mxu0 0.0
    %274 = vmatpush1.msra.mxu0 0.0
    %275 = vmatprep.subr.mxu0 0.0
    %276 = vmatpush1.msra.mxu0 0.0
    %277 = vmatprep.subr.mxu0 0.0
    %278 = vmatpush1.msra.mxu0 0.0
    %279 = vmatprep.subr.mxu0 0.0
    %280 = vmatpush1.msra.mxu0 0.0
    %281 = vmatprep.subr.mxu0 0.0
    %282 = vmatpush1.msra.mxu0 0.0
    %283 = vmatprep.subr.mxu0 0.0
    %284 = vmatpush1.msra.mxu0 0.0
    %285 = vmatprep.subr.mxu0 0.0
    %286 = vmatpush1.msra.mxu0 0.0
    %287 = vmatprep.subr.mxu0 0.0
    %288 = vmatpush1.msra.mxu0 0.0
    %289 = vmatprep.subr.mxu0 0.0
    %290 = vmatpush1.msra.mxu0 0.0
    %291 = vmatprep.subr.mxu0 0.0
    %292 = vmatpush1.msra.mxu0 0.0
    %293 = vmatprep.subr.mxu0 0.0
    %294 = vmatpush1.msra.mxu0 0.0
    %295 = vmatprep.subr.mxu0 0.0
    %296 = vmatpush1.msra.mxu0 0.0
    %297 = vmatprep.subr.mxu0 0.0
    %298 = vmatpush1.msra.mxu0 0.0
    %299 = vmatprep.mubr.f32.mxu0 0.0
    %300 = vmatmul.mubr.f32.gmra.mrb[0].mxu0 %v230
    %v301 = vpop.f32.mrb[0].mxu0
    %v302 = vadd.f32 %v227, %v301
    %v303 = vpop.f32.mrb[0].mxu0
    %304 = vmatprep.mubr.f32.mxu0 0.0
    %305 = vmatmul.mubr.f32.gmra.mrb[0].mxu0 %v233
    %v306 = vpop.f32.mrb[0].mxu0
    %v307 = vadd.f32 %v227, %v306
    %v308 = vpop.f32.mrb[0].mxu0
    %309 = vdwg.mxu0
    %310 = vst [vmem:[#allocation8] sm:$0xff] %v302
    %311 = vst [vmem:[#allocation8 + $0x8] sm:$0xff] %v307
    // Predicated region
    $region42: #{tpu_custom_call.1} parent=1 // pred_check
      _
    $region43: #{tpu_custom_call.1} parent=1 // pred_check_branch
      %313 = sbr.rel (0) target = $region45
    $region44: #{tpu_custom_call.1} parent=1 // pred_region
      %s315 = ssub.s32 256, 256
      %316 = vsyncadd [#allocation4], %s315
      %s317 = sshll.u32 [#allocation8], 4
      %s318 = int_to_ptr.vmem [resolvable:$true] %s317
      %323 = dma.vmem_to_hbm [thread:$0]  %s318, 256, %s7, [#allocation4], 128, 128, 8
    $region45: #{tpu_custom_call.1} parent=1 // pred_fallthru
      _
    // Predicated region
    $region46: #{tpu_custom_call.1} parent=1 // pred_check
      _
    $region47: #{tpu_custom_call.1} parent=1 // pred_check_branch
      %325 = sbr.rel (0) target = $region49
    $region48: #{tpu_custom_call.1} parent=1 // pred_region
      %326 = dma.done [#allocation4], 256
    $region49: #{tpu_custom_call.1} parent=1 // pred_fallthru
      _
    %327 = vsyncpa [#allocation3], 1
    %328 = vsyncpa [#allocation6], 1
    %329 = vsyncpa [#allocation4], 1

</llo_original>
